<compile_context>
chip_gen: v7x
topology: tpu7x:2x2x1
jax: 0.10.0
libtpu: 0.0.40
codegen_flags: <defaults>
</compile_context>

<pallas_src>
import functools
import math

import jax
import jax.numpy as jnp
from jax.experimental import pallas as pl
from jax.experimental.pallas import tpu as pltpu


# ----------------------------------------------------------------------------
# In-kernel math helpers
# ----------------------------------------------------------------------------
def _erf(x):
    # TODO(synk): lax.erf lowering is not guaranteed in Mosaic; use an accurate
    # (|err| < 1.2e-7) exp/abs/where polynomial so we match nn.GELU()'s exact
    # erf formulation (tanh-approx GELU would be cheaper but not bit-parity).
    a = jnp.abs(x)
    t = 1.0 / (1.0 + 0.5 * a)
    poly = -a * a - 1.26551223 + t * (1.00002368 + t * (0.37409196 + t * (
        0.09678418 + t * (-0.18628806 + t * (0.27886807 + t * (-1.13520398 + t * (
            1.48851587 + t * (-0.82215223 + t * 0.17087277))))))))
    y = t * jnp.exp(poly)
    return jnp.where(x >= 0.0, 1.0 - y, y - 1.0)


def _gelu_exact(x):
    return 0.5 * x * (1.0 + _erf(x * 0.7071067811865476))


def _layernorm(x, g, b, eps):
    mean = jnp.mean(x, axis=-1, keepdims=True)
    xc = x - mean
    var = jnp.mean(xc * xc, axis=-1, keepdims=True)
    return xc * jax.lax.rsqrt(var + eps) * g + b


def _full_spec(shape):
    # Full-array block (block_shape == array shape is exempt from (8,128) rule).
    return pl.BlockSpec(shape, lambda *_: (0,) * len(shape))


# ----------------------------------------------------------------------------
# Kernel 1: fused patch-embed MLP  (Linear -> ReLU -> Linear -> ReLU -> Linear)
# ----------------------------------------------------------------------------
def _patch_embed_kernel(x_ref, w0_ref, b0_ref, w1_ref, b1_ref, w2_ref, b2_ref,
                        o_ref):
    h = jnp.dot(x_ref[...], w0_ref[...], preferred_element_type=jnp.float32)
    h = jnp.maximum(h + b0_ref[...], 0.0)
    h = jnp.dot(h, w1_ref[...], preferred_element_type=jnp.float32)
    h = jnp.maximum(h + b1_ref[...], 0.0)
    o_ref[...] = (jnp.dot(h, w2_ref[...], preferred_element_type=jnp.float32)
                  + b2_ref[...])


def patch_embed_pallas(x2, p):
    # x2: (B*H, W) -> (B*H, D); single grid step, all intermediates in VMEM.
    m, w = x2.shape
    h0 = p["pe_w0"].shape[1]
    h1 = p["pe_w1"].shape[1]
    d = p["pe_w2"].shape[1]
    return pl.pallas_call(
        _patch_embed_kernel,
        out_shape=jax.ShapeDtypeStruct((m, d), jnp.float32),
        grid=(1,),
        in_specs=[_full_spec((m, w)),
                  _full_spec((w, h0)), _full_spec((1, h0)),
                  _full_spec((h0, h1)), _full_spec((1, h1)),
                  _full_spec((h1, d)), _full_spec((1, d))],
        out_specs=_full_spec((m, d)),
    )(x2, p["pe_w0"], p["pe_b0"].reshape(1, h0),
      p["pe_w1"], p["pe_b1"].reshape(1, h1),
      p["pe_w2"], p["pe_b2"].reshape(1, d))


# ----------------------------------------------------------------------------
# Kernel 2: fully fused transformer block (per batch element)
# ----------------------------------------------------------------------------
def _block_kernel(*refs, num_heads, head_dim, scale, eps, has_skip):
    if has_skip:
        (x_ref, s_ref, swx_ref, sws_ref, sb_ref,
         g1_ref, b1_ref, qw_ref, qb_ref, pw_ref, pb_ref,
         g2_ref, b2_ref, f1w_ref, f1b_ref, f2w_ref, f2b_ref, o_ref) = refs
    else:
        (x_ref,
         g1_ref, b1_ref, qw_ref, qb_ref, pw_ref, pb_ref,
         g2_ref, b2_ref, f1w_ref, f1b_ref, f2w_ref, f2b_ref, o_ref) = refs

    x = x_ref[0]                                            # (S, D) f32
    if has_skip:
        # cat([x, skip]) @ W_skip  ==  x @ W[:D] + skip @ W[D:]   (no concat)
        x = (jnp.dot(x, swx_ref[...], preferred_element_type=jnp.float32)
             + jnp.dot(s_ref[0], sws_ref[...], preferred_element_type=jnp.float32)
             + sb_ref[...])

    d = x.shape[-1]

    # ---- attention branch: LayerNorm fused into the QKV matmul ----
    h = _layernorm(x, g1_ref[...], b1_ref[...], eps)
    qkv = (jnp.dot(h, qw_ref[...], preferred_element_type=jnp.float32)
           + qb_ref[...])                                   # (S, 3D)
    proj_w = pw_ref[...]
    attn = jnp.zeros_like(x)
    for hi in range(num_heads):
        lo = hi * head_dim
        q = qkv[:, lo:lo + head_dim]
        k = qkv[:, d + lo:d + lo + head_dim]
        v = qkv[:, 2 * d + lo:2 * d + lo + head_dim]
        s = jax.lax.dot_general(q, k, (((1,), (1,)), ((), ())),
                                preferred_element_type=jnp.float32) * scale
        s = s - jnp.max(s, axis=-1, keepdims=True)
        p = jnp.exp(s)
        p = p * pl.reciprocal(jnp.sum(p, axis=-1, keepdims=True), approx=True)
        o_h = jnp.dot(p, v, preferred_element_type=jnp.float32)     # (S, hd)
        # fold this head's slice of the output projection in here, so heads
        # never need to be re-concatenated along the lane dim.
        attn = attn + jnp.dot(o_h, proj_w[lo:lo + head_dim, :],
                              preferred_element_type=jnp.float32)
    x = x + attn + pb_ref[...]                              # residual + proj bias

    # ---- MLP branch: LayerNorm fused into the FC1 matmul ----
    h = _layernorm(x, g2_ref[...], b2_ref[...], eps)
    h = jnp.dot(h, f1w_ref[...], preferred_element_type=jnp.float32) + f1b_ref[...]
    h = _gelu_exact(h)
    x = x + jnp.dot(h, f2w_ref[...], preferred_element_type=jnp.float32) + f2b_ref[...]

    o_ref[0] = x


def block_pallas(x, p, num_heads, skip=None):
    B, S, D = x.shape
    hd = D // num_heads
    hidden = p["fc1_w"].shape[1]
    seq_spec = pl.BlockSpec((1, S, D), lambda b: (b, 0, 0))

    args = [x]
    in_specs = [seq_spec]
    if skip is not None:
        args += [skip, p["skip_w"][:D], p["skip_w"][D:], p["skip_b"].reshape(1, D)]
        in_specs += [seq_spec, _full_spec((D, D)), _full_spec((D, D)),
                     _full_spec((1, D))]
    args += [p["norm1_w"].reshape(1, D), p["norm1_b"].reshape(1, D),
             p["qkv_w"], p["qkv_b"].reshape(1, 3 * D),
             p["proj_w"], p["proj_b"].reshape(1, D),
             p["norm2_w"].reshape(1, D), p["norm2_b"].reshape(1, D),
             p["fc1_w"], p["fc1_b"].reshape(1, hidden),
             p["fc2_w"], p["fc2_b"].reshape(1, D)]
    in_specs += [_full_spec((1, D)), _full_spec((1, D)),
                 _full_spec((D, 3 * D)), _full_spec((1, 3 * D)),
                 _full_spec((D, D)), _full_spec((1, D)),
                 _full_spec((1, D)), _full_spec((1, D)),
                 _full_spec((D, hidden)), _full_spec((1, hidden)),
                 _full_spec((hidden, D)), _full_spec((1, D))]

    kernel = functools.partial(_block_kernel, num_heads=num_heads, head_dim=hd,
                               scale=hd ** (-0.5), eps=1e-5,
                               has_skip=skip is not None)
    return pl.pallas_call(
        kernel,
        out_shape=jax.ShapeDtypeStruct((B, S, D), jnp.float32),
        grid=(B,),
        in_specs=in_specs,
        out_specs=seq_spec,
        compiler_params=pltpu.CompilerParams(dimension_semantics=("parallel",)),
    )(*args)


# ----------------------------------------------------------------------------
# Kernel 3: fused head = final LayerNorm + decoder linear + 3x3 conv + residual
# ----------------------------------------------------------------------------
def _head_kernel(x_ref, res_ref, g_ref, b_ref, dw_ref, db_ref,
                 sv_ref, wh_ref, cb_ref, o_ref, *, eps):
    x = x_ref[0]                                            # (S, D)
    h = _layernorm(x, g_ref[...], b_ref[...], eps)
    dec = jnp.dot(h, dw_ref[...], preferred_element_type=jnp.float32) + db_ref[...]
    acc = res_ref[0] + cb_ref[...]                          # input residual + conv bias
    for dy in range(3):
        # 3x3 SAME conv as banded matmuls: Sv[dy] also drops the time-token row
        # and applies zero padding, so no unaligned slices / rolls are needed.
        t = jnp.dot(dec, wh_ref[dy], preferred_element_type=jnp.float32)    # (S, W)
        acc = acc + jnp.dot(sv_ref[dy], t, preferred_element_type=jnp.float32)
    o_ref[0] = acc


def _conv_as_matmuls(conv_w, H, S, W):
    """Build Sv[dy] (H,S) row-shift/select and Wh[dy] (W,W) banded matrices so
    conv3x3(dec[1:]) == sum_dy Sv[dy] @ (dec @ Wh[dy])   (zero padded)."""
    y = jnp.arange(H)[:, None]
    r = jnp.arange(S)[None, :]
    c = jnp.arange(W)[:, None]
    j = jnp.arange(W)[None, :]
    sv, wh = [], []
    for dy in range(3):
        sv.append(((r == y + dy) & (r >= 1) & (r <= H)).astype(jnp.float32))
        dx = c - j + 1
        wh.append(jnp.where((dx >= 0) & (dx <= 2),
                            conv_w[dy, jnp.clip(dx, 0, 2)], 0.0))
    return jnp.stack(sv), jnp.stack(wh)


def head_pallas(seq, res, p, img_size):
    # seq: (B, S, D) transformer output; res: (B, H, W) channel-0 input residual
    B, S, D = seq.shape
    H, W = img_size
    sv, wh = _conv_as_matmuls(p["conv_w"], H, S, W)
    return pl.pallas_call(
        functools.partial(_head_kernel, eps=1e-5),
        out_shape=jax.ShapeDtypeStruct((B, H, W), jnp.float32),
        grid=(B,),
        in_specs=[pl.BlockSpec((1, S, D), lambda b: (b, 0, 0)),
                  pl.BlockSpec((1, H, W), lambda b: (b, 0, 0)),
                  _full_spec((1, D)), _full_spec((1, D)),
                  _full_spec((D, W)), _full_spec((1, W)),
                  _full_spec((3, H, S)), _full_spec((3, W, W)),
                  _full_spec((1, 1))],
        out_specs=pl.BlockSpec((1, H, W), lambda b: (b, 0, 0)),
        compiler_params=pltpu.CompilerParams(dimension_semantics=("parallel",)),
    )(seq, res, p["norm_w"].reshape(1, D), p["norm_b"].reshape(1, D),
      p["dec_w"], p["dec_b"].reshape(1, W), sv, wh, p["conv_b"].reshape(1, 1))


# ----------------------------------------------------------------------------
# Model glue (tiny ops kept in plain JAX) + parameter init
# ----------------------------------------------------------------------------
def timestep_embedding_jax(timesteps, dim, max_period=10000):
    half = dim // 2
    freqs = jnp.exp(-math.log(max_period) *
                    jnp.arange(half, dtype=jnp.float32) / half)
    args = timesteps[:, None].astype(jnp.float32) * freqs[None]
    emb = jnp.concatenate([jnp.cos(args), jnp.sin(args)], axis=-1)
    if dim % 2:
        emb = jnp.concatenate([emb, jnp.zeros_like(emb[:, :1])], axis=-1)
    return emb


def trunc_normal(key, shape, std=0.02):
    return std * jax.random.truncated_normal(key, -2.0, 2.0, shape, jnp.float32)


def make_block_params(key, dim, mlp_ratio, skip):
    ks = jax.random.split(key, 5)
    hidden = int(dim * mlp_ratio)
    p = {
        "norm1_w": jnp.ones((dim,), jnp.float32),
        "norm1_b": jnp.zeros((dim,), jnp.float32),
        "qkv_w": trunc_normal(ks[0], (dim, 3 * dim)),
        "qkv_b": jnp.zeros((3 * dim,), jnp.float32),   # qkv_bias=False -> zero
        "proj_w": trunc_normal(ks[1], (dim, dim)),
        "proj_b": jnp.zeros((dim,), jnp.float32),
        "norm2_w": jnp.ones((dim,), jnp.float32),
        "norm2_b": jnp.zeros((dim,), jnp.float32),
        "fc1_w": trunc_normal(ks[2], (dim, hidden)),
        "fc1_b": jnp.zeros((hidden,), jnp.float32),
        "fc2_w": trunc_normal(ks[3], (hidden, dim)),
        "fc2_b": jnp.zeros((dim,), jnp.float32),
    }
    if skip:
        p["skip_w"] = trunc_normal(ks[4], (2 * dim, dim))
        p["skip_b"] = jnp.zeros((dim,), jnp.float32)
    return p


def init_params(key, img_size, embed_dim, depth, mlp_ratio=4.0):
    L, W = img_size
    keys = jax.random.split(key, 10)
    n_half = depth // 2
    params = {
        "pe_w0": trunc_normal(keys[0], (W, 256)),
        "pe_b0": jnp.zeros((256,), jnp.float32),
        "pe_w1": trunc_normal(keys[1], (256, 256)),
        "pe_b1": jnp.zeros((256,), jnp.float32),
        "pe_w2": trunc_normal(keys[2], (256, embed_dim)),
        "pe_b2": jnp.zeros((embed_dim,), jnp.float32),
        "pos_embed": trunc_normal(keys[3], (1, 1 + L, embed_dim)),
        "norm_w": jnp.ones((embed_dim,), jnp.float32),
        "norm_b": jnp.zeros((embed_dim,), jnp.float32),
        "dec_w": trunc_normal(keys[7], (embed_dim, W)),
        "dec_b": jnp.zeros((W,), jnp.float32),
        "conv_w": 0.02 * jax.random.normal(keys[8], (3, 3), jnp.float32),
        "conv_b": jnp.zeros((1,), jnp.float32),
    }
    ikeys = jax.random.split(keys[4], n_half)
    okeys = jax.random.split(keys[6], n_half)
    params["in_blocks"] = [make_block_params(ikeys[i], embed_dim, mlp_ratio, False)
                           for i in range(n_half)]
    params["mid_block"] = make_block_params(keys[5], embed_dim, mlp_ratio, False)
    params["out_blocks"] = [make_block_params(okeys[i], embed_dim, mlp_ratio, True)
                            for i in range(n_half)]
    return params


def uvit_sino_forward(params, x, timesteps, *, embed_dim, num_heads, img_size,
                      out_chans=1):
    B = x.shape[0]
    H, W = img_size
    # patch_embed MLP over the row (W) axis: (B, 1, H, W) -> (B, H, D)
    tokens = patch_embed_pallas(x[:, 0].reshape(B * H, W), params)
    tokens = tokens.reshape(B, H, embed_dim)
    # time token (time_embed = Identity since mlp_time_embed=False)
    tt = timestep_embedding_jax(timesteps, embed_dim)
    seq = jnp.concatenate([tt[:, None, :], tokens], axis=1)      # (B, 1+L, D)
    seq = seq + params["pos_embed"]
    skips = []
    for bp in params["in_blocks"]:
        seq = block_pallas(seq, bp, num_heads)
        skips.append(seq)
    seq = block_pallas(seq, params["mid_block"], num_heads)
    for bp in params["out_blocks"]:
        seq = block_pallas(seq, bp, num_heads, skip=skips.pop())
    # fused: final LayerNorm + decoder linear + 3x3 conv + channel-0 residual
    out = head_pallas(seq, x[:, 0], params, img_size)
    return out[:, None, :, :]


# ----------------------------------------------------------------------------
if __name__ == "__main__":
    B = 2
    img_size = (16, 64)       # (num_patches L, patch_dim W)
    embed_dim = 32
    num_heads = 4
    depth = 2

    key = jax.random.PRNGKey(0)
    kp, kx, kt = jax.random.split(key, 3)
    params = init_params(kp, img_size, embed_dim, depth)

    x = jax.random.normal(kx, (B, 1, img_size[0], img_size[1]), jnp.float32)
    timesteps = jax.random.uniform(kt, (B,), jnp.float32, 0.0, 999.0)

    out = uvit_sino_forward(params, x, timesteps,
                            embed_dim=embed_dim, num_heads=num_heads,
                            img_size=img_size, out_chans=1)
    jax.block_until_ready(out)
    assert out.shape == (B, 1, img_size[0], img_size[1])
    assert jnp.all(jnp.isfinite(out))
    print("KERNEL_OK")
</pallas_src>

<mosaic_0001>
module attributes {stable_mosaic.version = 11 : i64} {
  func.func @_patch_embed_kernel(%arg0: i32, %arg1: memref<32x64xf32, #tpu.memory_space<vmem>>, %arg2: memref<64x256xf32, #tpu.memory_space<vmem>>, %arg3: memref<1x256xf32, #tpu.memory_space<vmem>>, %arg4: memref<256x256xf32, #tpu.memory_space<vmem>>, %arg5: memref<1x256xf32, #tpu.memory_space<vmem>>, %arg6: memref<256x32xf32, #tpu.memory_space<vmem>>, %arg7: memref<1x32xf32, #tpu.memory_space<vmem>>, %arg8: memref<32x32xf32, #tpu.memory_space<vmem>>) attributes {dimension_semantics = [#tpu.dimension_semantics<arbitrary>], iteration_bounds = array<i64: 1>, scalar_prefetch = 0 : i64, scratch_operands = 0 : i64, tpu.core_type = #tpu.core_type<tc>, window_params = [{pipeline_mode = #tpu.pipeline_mode<synchronous>, transform_indices = @transform_0, window_bounds = array<i64: 32, 64>}, {pipeline_mode = #tpu.pipeline_mode<synchronous>, transform_indices = @transform_1, window_bounds = array<i64: 64, 256>}, {pipeline_mode = #tpu.pipeline_mode<synchronous>, transform_indices = @transform_2, window_bounds = array<i64: 1, 256>}, {pipeline_mode = #tpu.pipeline_mode<synchronous>, transform_indices = @transform_3, window_bounds = array<i64: 256, 256>}, {pipeline_mode = #tpu.pipeline_mode<synchronous>, transform_indices = @transform_4, window_bounds = array<i64: 1, 256>}, {pipeline_mode = #tpu.pipeline_mode<synchronous>, transform_indices = @transform_5, window_bounds = array<i64: 256, 32>}, {pipeline_mode = #tpu.pipeline_mode<synchronous>, transform_indices = @transform_6, window_bounds = array<i64: 1, 32>}, {pipeline_mode = #tpu.pipeline_mode<synchronous>, transform_indices = @transform_7, window_bounds = array<i64: 32, 32>}]} {
    %c0 = arith.constant 0 : index
    %c0_0 = arith.constant 0 : index
    %0 = vector.load %arg1[%c0, %c0_0] : memref<32x64xf32, #tpu.memory_space<vmem>>, vector<32x64xf32>
    %c0_1 = arith.constant 0 : index
    %c0_2 = arith.constant 0 : index
    %1 = vector.load %arg2[%c0_1, %c0_2] : memref<64x256xf32, #tpu.memory_space<vmem>>, vector<64x256xf32>
    %cst = arith.constant dense<0.000000e+00> : vector<32x256xf32>
    %2 = tpu.matmul %0, %1, %cst {dimension_numbers = #tpu.dot_dimension_numbers<[1], [0], [0], [1], [0, 0, 1, 1], [], []>} : vector<32x64xf32>, vector<64x256xf32>, vector<32x256xf32> -> vector<32x256xf32>
    %c0_3 = arith.constant 0 : index
    %c0_4 = arith.constant 0 : index
    %3 = vector.load %arg3[%c0_3, %c0_4] : memref<1x256xf32, #tpu.memory_space<vmem>>, vector<1x256xf32>
    %4 = vector.broadcast %3 : vector<1x256xf32> to vector<32x256xf32>
    %5 = arith.addf %2, %4 : vector<32x256xf32>
    %cst_5 = arith.constant 0.000000e+00 : f32
    %6 = vector.broadcast %cst_5 : f32 to vector<32x256xf32>
    %7 = arith.maximumf %5, %6 : vector<32x256xf32>
    %c0_6 = arith.constant 0 : index
    %c0_7 = arith.constant 0 : index
    %8 = vector.load %arg4[%c0_6, %c0_7] : memref<256x256xf32, #tpu.memory_space<vmem>>, vector<256x256xf32>
    %cst_8 = arith.constant dense<0.000000e+00> : vector<32x256xf32>
    %9 = tpu.matmul %7, %8, %cst_8 {dimension_numbers = #tpu.dot_dimension_numbers<[1], [0], [0], [1], [0, 0, 1, 1], [], []>} : vector<32x256xf32>, vector<256x256xf32>, vector<32x256xf32> -> vector<32x256xf32>
    %c0_9 = arith.constant 0 : index
    %c0_10 = arith.constant 0 : index
    %10 = vector.load %arg5[%c0_9, %c0_10] : memref<1x256xf32, #tpu.memory_space<vmem>>, vector<1x256xf32>
    %11 = vector.broadcast %10 : vector<1x256xf32> to vector<32x256xf32>
    %12 = arith.addf %9, %11 : vector<32x256xf32>
    %cst_11 = arith.constant 0.000000e+00 : f32
    %13 = vector.broadcast %cst_11 : f32 to vector<32x256xf32>
    %14 = arith.maximumf %12, %13 : vector<32x256xf32>
    %c0_12 = arith.constant 0 : index
    %c0_13 = arith.constant 0 : index
    %15 = vector.load %arg6[%c0_12, %c0_13] : memref<256x32xf32, #tpu.memory_space<vmem>>, vector<256x32xf32>
    %cst_14 = arith.constant dense<0.000000e+00> : vector<32x32xf32>
    %16 = tpu.matmul %14, %15, %cst_14 {dimension_numbers = #tpu.dot_dimension_numbers<[1], [0], [0], [1], [0, 0, 1, 1], [], []>} : vector<32x256xf32>, vector<256x32xf32>, vector<32x32xf32> -> vector<32x32xf32>
    %c0_15 = arith.constant 0 : index
    %c0_16 = arith.constant 0 : index
    %17 = vector.load %arg7[%c0_15, %c0_16] : memref<1x32xf32, #tpu.memory_space<vmem>>, vector<1x32xf32>
    %18 = vector.broadcast %17 : vector<1x32xf32> to vector<32x32xf32>
    %19 = arith.addf %16, %18 : vector<32x32xf32>
    %c0_17 = arith.constant 0 : index
    %c0_18 = arith.constant 0 : index
    %20 = vector.load %arg8[%c0_17, %c0_18] : memref<32x32xf32, #tpu.memory_space<vmem>>, vector<32x32xf32>
    tpu.vector_store %arg8[%c0_17, %c0_18], %19 {strides = array<i32>} : memref<32x32xf32, #tpu.memory_space<vmem>>, vector<32x32xf32>,
    return
  }
  func.func @transform_0(%arg0: i32) -> (i32, i32) {
    %c0_i32 = arith.constant 0 : i32
    %c0_i32_0 = arith.constant 0 : i32
    %c0_i32_1 = arith.constant 0 : i32
    return %c0_i32, %c0_i32_0 : i32, i32
  }
  func.func @transform_1(%arg0: i32) -> (i32, i32) {
    %c0_i32 = arith.constant 0 : i32
    %c0_i32_0 = arith.constant 0 : i32
    %c0_i32_1 = arith.constant 0 : i32
    return %c0_i32, %c0_i32_0 : i32, i32
  }
  func.func @transform_2(%arg0: i32) -> (i32, i32) {
    %c0_i32 = arith.constant 0 : i32
    %c0_i32_0 = arith.constant 0 : i32
    %c0_i32_1 = arith.constant 0 : i32
    return %c0_i32, %c0_i32_0 : i32, i32
  }
  func.func @transform_3(%arg0: i32) -> (i32, i32) {
    %c0_i32 = arith.constant 0 : i32
    %c0_i32_0 = arith.constant 0 : i32
    %c0_i32_1 = arith.constant 0 : i32
    return %c0_i32, %c0_i32_0 : i32, i32
  }
  func.func @transform_4(%arg0: i32) -> (i32, i32) {
    %c0_i32 = arith.constant 0 : i32
    %c0_i32_0 = arith.constant 0 : i32
    %c0_i32_1 = arith.constant 0 : i32
    return %c0_i32, %c0_i32_0 : i32, i32
  }
  func.func @transform_5(%arg0: i32) -> (i32, i32) {
    %c0_i32 = arith.constant 0 : i32
    %c0_i32_0 = arith.constant 0 : i32
    %c0_i32_1 = arith.constant 0 : i32
    return %c0_i32, %c0_i32_0 : i32, i32
  }
  func.func @transform_6(%arg0: i32) -> (i32, i32) {
    %c0_i32 = arith.constant 0 : i32
    %c0_i32_0 = arith.constant 0 : i32
    %c0_i32_1 = arith.constant 0 : i32
    return %c0_i32, %c0_i32_0 : i32, i32
  }
  func.func @transform_7(%arg0: i32) -> (i32, i32) {
    %c0_i32 = arith.constant 0 : i32
    %c0_i32_0 = arith.constant 0 : i32
    %c0_i32_1 = arith.constant 0 : i32
    return %c0_i32, %c0_i32_0 : i32, i32
  }
}

</mosaic_0001>

<llo_original>
// kernel: tpu_custom_call.1
$region0: #{tpu_custom_call.1}
  #allocation0 [shape = 'u32[]', space=smem, size = 0x4, offset = 0x4, fixed_abs, tag = 'smem constant byte address 0x4 - core index']
  #allocation1 [shape = 'u32[144,128]{1,0:T(1,128)}', space=vmem, size = 0x12000, scoped, tag = 'internal scratch']
  %s0 = inlined_call_operand.vmem [shape: f32[32,64], index: 0, kind: input, shape index: {}]
  %s1 = inlined_call_operand.vmem [shape: f32[64,256], index: 1, kind: input, shape index: {}]
  %s2 = inlined_call_operand.vmem [shape: f32[1,256], index: 2, kind: input, shape index: {}]
  %s3 = inlined_call_operand.hbm [shape: f32[256,256], index: 3, kind: input, shape index: {}]
  %s4 = inlined_call_operand.vmem [shape: f32[1,256], index: 4, kind: input, shape index: {}]
  %s5 = inlined_call_operand.vmem [shape: f32[256,32], index: 5, kind: input, shape index: {}]
  %s6 = inlined_call_operand.vmem [shape: f32[1,32], index: 6, kind: input, shape index: {}]
  %s7 = inlined_call_operand.hbm [shape: f32[32,32], index: 7, kind: output, shape index: {}]
  %s8 = sld [smem:[#allocation0]]
  $region42: #{tpu_custom_call.1} parent=0
    _
  %s10 = ssub.s32 1, %s8
  %s11 = scalar_select 0, %s10, %s8
  $region1: #{tpu_custom_call.1} parent=0
    #allocation2 [shape = 'u8[262144]{0}', space=vmem, size = 0x40000, scoped, tag = 'input window, operand 3, single buffered']
    #allocation3 [shape = 's32[1]{0}', space=sflag, size = 0x4, scoped, tag = 'scoped memory for tpu_custom_call.1']
    #allocation4 [shape = 's32[1]{0}', space=sflag, size = 0x4, scoped, tag = 'scoped memory for tpu_custom_call.1']
    #allocation5 [shape = 'u8[16384]{0}', space=vmem, size = 0x4000, scoped, tag = 'output window, operand 0, single buffered']
    %12 = vsyncpa [#allocation3], 0
    %13 = vsyncpa [#allocation4], 0
    // Predicated region
    $region2: #{tpu_custom_call.1} parent=1 // pred_check
      _
    $region3: #{tpu_custom_call.1} parent=1 // pred_check_branch
      %15 = sbr.rel (0) target = $region5
    $region4: #{tpu_custom_call.1} parent=1 // pred_region
      _
    $region5: #{tpu_custom_call.1} parent=1 // pred_fallthru
      _
    // Predicated region
    $region6: #{tpu_custom_call.1} parent=1 // pred_check
      _
    $region7: #{tpu_custom_call.1} parent=1 // pred_check_branch
      %17 = sbr.rel (0) target = $region9
    $region8: #{tpu_custom_call.1} parent=1 // pred_region
      _
    $region9: #{tpu_custom_call.1} parent=1 // pred_fallthru
      _
    // Predicated region
    $region10: #{tpu_custom_call.1} parent=1 // pred_check
      _
    $region11: #{tpu_custom_call.1} parent=1 // pred_check_branch
      %19 = sbr.rel (0) target = $region13
    $region12: #{tpu_custom_call.1} parent=1 // pred_region
      _
    $region13: #{tpu_custom_call.1} parent=1 // pred_fallthru
      _
    // Predicated region
    $region14: #{tpu_custom_call.1} parent=1 // pred_check
      _
    $region15: #{tpu_custom_call.1} parent=1 // pred_check_branch
      %21 = sbr.rel (0) target = $region17
    $region16: #{tpu_custom_call.1} parent=1 // pred_region
      %s23 = ssub.s32 8192, 8192
      %24 = vsyncadd [#allocation3], %s23
      %s25 = sshll.u32 [#allocation2], 4
      %s26 = int_to_ptr.vmem [resolvable:$true] %s25
      %31 = dma.hbm_to_vmem [thread:$0]  %s3, 8192, %s26, [#allocation3], 256, 256, 16
    $region17: #{tpu_custom_call.1} parent=1 // pred_fallthru
      _
    // Predicated region
    $region18: #{tpu_custom_call.1} parent=1 // pred_check
      _
    $region19: #{tpu_custom_call.1} parent=1 // pred_check_branch
      %33 = sbr.rel (0) target = $region21
    $region20: #{tpu_custom_call.1} parent=1 // pred_region
      _
    $region21: #{tpu_custom_call.1} parent=1 // pred_fallthru
      _
    // Predicated region
    $region22: #{tpu_custom_call.1} parent=1 // pred_check
      _
    $region23: #{tpu_custom_call.1} parent=1 // pred_check_branch
      %35 = sbr.rel (0) target = $region25
    $region24: #{tpu_custom_call.1} parent=1 // pred_region
      _
    $region25: #{tpu_custom_call.1} parent=1 // pred_fallthru
      _
    // Predicated region
    $region26: #{tpu_custom_call.1} parent=1 // pred_check
      _
    $region27: #{tpu_custom_call.1} parent=1 // pred_check_branch
      %37 = sbr.rel (0) target = $region29
    $region28: #{tpu_custom_call.1} parent=1 // pred_region
      _
    $region29: #{tpu_custom_call.1} parent=1 // pred_fallthru
      _
    // Predicated region
    $region30: #{tpu_custom_call.1} parent=1 // pred_check
      _
    $region31: #{tpu_custom_call.1} parent=1 // pred_check_branch
      %39 = sbr.rel (0) target = $region33
    $region32: #{tpu_custom_call.1} parent=1 // pred_region
      %40 = dma.done [#allocation3], 8192
    $region33: #{tpu_custom_call.1} parent=1 // pred_fallthru
      _
    %v41 = vld [vmem:[%s0] sm:$0xff]
    %v42 = vld [vmem:[%s0 + $0x8] sm:$0xff]
    %v43 = vld [vmem:[%s0 + $0x10] sm:$0xff]
    %v44 = vld [vmem:[%s0 + $0x18] sm:$0xff]
    %v45 = vld [vmem:[%s1] sm:$0xff]
    %v46 = vld [vmem:[%s1 + $0x8] sm:$0xff]
    %v47 = vld [vmem:[%s1 + $0x10] sm:$0xff]
    %v48 = vld [vmem:[%s1 + $0x18] sm:$0xff]
    %v49 = vld [vmem:[%s1 + $0x20] sm:$0xff]
    %v50 = vld [vmem:[%s1 + $0x28] sm:$0xff]
    %v51 = vld [vmem:[%s1 + $0x30] sm:$0xff]
    %v52 = vld [vmem:[%s1 + $0x38] sm:$0xff]
    %v53 = vld [vmem:[%s1 + $0x40] sm:$0xff]
    %v54 = vld [vmem:[%s1 + $0x48] sm:$0xff]
    %v55 = vld [vmem:[%s1 + $0x50] sm:$0xff]
    %v56 = vld [vmem:[%s1 + $0x58] sm:$0xff]
    %v57 = vld [vmem:[%s1 + $0x60] sm:$0xff]
    %v58 = vld [vmem:[%s1 + $0x68] sm:$0xff]
    %v59 = vld [vmem:[%s1 + $0x70] sm:$0xff]
    %v60 = vld [vmem:[%s1 + $0x78] sm:$0xff]
    %v61 = vld [vmem:[%s2] sm:$0x3]
    %v63 = vlaneseq
    %v64 = vshrl.u32 %v63, 7
    %v65 = vsub.s32 0, %v64
    %v66 = vrot.slane %v61, %v65
    %v67 = vlaneseq
    %v68 = vshrl.u32 %v67, 7
    %v69 = vsub.s32 1, %v68
    %v70 = vrot.slane %v61, %v69
    %vm73 = vcmask 523264
    %v75 = vsel %vm73, %v41, 0
    %v78 = vsel %vm73, %v42, 0
    %v81 = vsel %vm73, %v43, 0
    %v84 = vsel %vm73, %v44, 0
    %86 = vmatprep.subr.mxu0 %v46
    %87 = vmatpush1.msra.mxu0 %v45
    %88 = vmatprep.subr.mxu0 %v48
    %89 = vmatpush1.msra.mxu0 %v47
    %90 = vmatprep.subr.mxu0 %v50
    %91 = vmatpush1.msra.mxu0 %v49
    %92 = vmatprep.subr.mxu0 %v52
    %93 = vmatpush1.msra.mxu0 %v51
    %94 = vmatprep.subr.mxu0 %v54
    %95 = vmatpush1.msra.mxu0 %v53
    %96 = vmatprep.subr.mxu0 %v56
    %97 = vmatpush1.msra.mxu0 %v55
    %98 = vmatprep.subr.mxu0 %v58
    %99 = vmatpush1.msra.mxu0 %v57
    %100 = vmatprep.subr.mxu0 %v60
    %101 = vmatpush1.msra.mxu0 %v59
    %102 = vmatprep.subr.mxu0 0.0
    %103 = vmatpush1.msra.mxu0 0.0
    %104 = vmatprep.subr.mxu0 0.0
    %105 = vmatpush1.msra.mxu0 0.0
    %106 = vmatprep.subr.mxu0 0.0
    %107 = vmatpush1.msra.mxu0 0.0
    %108 = vmatprep.subr.mxu0 0.0
    %109 = vmatpush1.msra.mxu0 0.0
    %110 = vmatprep.subr.mxu0 0.0
    %111 = vmatpush1.msra.mxu0 0.0
    %112 = vmatprep.subr.mxu0 0.0
    %113 = vmatpush1.msra.mxu0 0.0
    %114 = vmatprep.subr.mxu0 0.0
    %115 = vmatpush1.msra.mxu0 0.0
    %116 = vmatprep.subr.mxu0 0.0
    %117 = vmatpush1.msra.mxu0 0.0
    %118 = vmatprep.subr.mxu0 0.0
    %119 = vmatpush1.msra.mxu0 0.0
    %120 = vmatprep.subr.mxu0 0.0
    %121 = vmatpush1.msra.mxu0 0.0
    %122 = vmatprep.subr.mxu0 0.0
    %123 = vmatpush1.msra.mxu0 0.0
    %124 = vmatprep.subr.mxu0 0.0
    %125 = vmatpush1.msra.mxu0 0.0
    %126 = vmatprep.subr.mxu0 0.0
    %127 = vmatpush1.msra.mxu0 0.0
    %128 = vmatprep.subr.mxu0 0.0
    %129 = vmatpush1.msra.mxu0 0.0
    %130 = vmatprep.subr.mxu0 0.0
    %131 = vmatpush1.msra.mxu0 0.0
    %132 = vmatprep.subr.mxu0 0.0
    %133 = vmatpush1.msra.mxu0 0.0
    %134 = vmatprep.subr.mxu0 0.0
    %135 = vmatpush1.msra.mxu0 0.0
    %136 = vmatprep.subr.mxu0 0.0
    %137 = vmatpush1.msra.mxu0 0.0
    %138 = vmatprep.subr.mxu0 0.0
    %139 = vmatpush1.msra.mxu0 0.0
    %140 = vmatprep.subr.mxu0 0.0
    %141 = vmatpush1.msra.mxu0 0.0
    %142 = vmatprep.subr.mxu0 0.0
    %143 = vmatpush1.msra.mxu0 0.0
    %144 = vmatprep.subr.mxu0 0.0
    %145 = vmatpush1.msra.mxu0 0.0
    %146 = vmatprep.subr.mxu0 0.0
    %147 = vmatpush1.msra.mxu0 0.0
    %148 = vmatprep.subr.mxu0 0.0
    %149 = vmatpush1.msra.mxu0 0.0
    %150 = vmatprep.mubr.f32.mxu0 0.0
    %151 = vmatmul.mubr.f32.gmra.mrb[0].mxu0 %v75
    %v152 = vpop.f32.mrb[0].mxu0
    %v153 = vadd.f32 %v66, %v152
    %v154 = vpop.f32.mrb[0].mxu0
    %v155 = vadd.f32 %v70, %v154
    %156 = vmatprep.mubr.f32.mxu0 0.0
    %157 = vmatmul.mubr.f32.gmra.mrb[0].mxu0 %v78
    %v158 = vpop.f32.mrb[0].mxu0
    %v159 = vadd.f32 %v66, %v158
    %v160 = vpop.f32.mrb[0].mxu0
    %v161 = vadd.f32 %v70, %v160
    %162 = vmatprep.mubr.f32.mxu0 0.0
    %163 = vmatmul.mubr.f32.gmra.mrb[0].mxu0 %v81
    %v164 = vpop.f32.mrb[0].mxu0
    %v165 = vadd.f32 %v66, %v164
    %v166 = vpop.f32.mrb[0].mxu0
    %v167 = vadd.f32 %v70, %v166
    %168 = vmatprep.mubr.f32.mxu0 0.0
    %169 = vmatmul.mubr.f32.gmra.mrb[0].mxu0 %v84
    %v170 = vpop.f32.mrb[0].mxu0
    %v171 = vadd.f32 %v66, %v170
    %v172 = vpop.f32.mrb[0].mxu0
    %v173 = vadd.f32 %v70, %v172
    %174 = vdwg.mxu0
    %v175 = vmax.f32 %v153, 0.0
    %v176 = vmax.f32 %v155, 0.0
    %v177 = vmax.f32 %v159, 0.0
    %v178 = vmax.f32 %v161, 0.0
    %v179 = vmax.f32 %v165, 0.0
    %v180 = vmax.f32 %v167, 0.0
    %v181 = vmax.f32 %v171, 0.0
    %v182 = vmax.f32 %v173, 0.0
    %v183 = vld [vmem:[#allocation2] sm:$0xff]
    %v184 = vld [vmem:[#allocation2 + $0x8] sm:$0xff]
    %v185 = vld [vmem:[#allocation2 + $0x10] sm:$0xff]
    %v186 = vld [vmem:[#allocation2 + $0x18] sm:$0xff]
    %v187 = vld [vmem:[#allocation2 + $0x20] sm:$0xff]
    %v188 = vld [vmem:[#allocation2 + $0x28] sm:$0xff]
    %v189 = vld [vmem:[#allocation2 + $0x30] sm:$0xff]
    %v190 = vld [vmem:[#allocation2 + $0x38] sm:$0xff]
    %v191 = vld [vmem:[#allocation2 + $0x40] sm:$0xff]
    %v192 = vld [vmem:[#allocation2 + $0x48] sm:$0xff]
    %v193 = vld [vmem:[#allocation2 + $0x50] sm:$0xff]
    %v194 = vld [vmem:[#allocation2 + $0x58] sm:$0xff]
    %v195 = vld [vmem:[#allocation2 + $0x60] sm:$0xff]
    %v196 = vld [vmem:[#allocation2 + $0x68] sm:$0xff]
    %v197 = vld [vmem:[#allocation2 + $0x70] sm:$0xff]
    %v198 = vld [vmem:[#allocation2 + $0x78] sm:$0xff]
    %v199 = vld [vmem:[#allocation2 + $0x80] sm:$0xff]
    %v200 = vld [vmem:[#allocation2 + $0x88] sm:$0xff]
    %v201 = vld [vmem:[#allocation2 + $0x90] sm:$0xff]
    %v202 = vld [vmem:[#allocation2 + $0x98] sm:$0xff]
    %v203 = vld [vmem:[#allocation2 + $0xa0] sm:$0xff]
    %v204 = vld [vmem:[#allocation2 + $0xa8] sm:$0xff]
    %v205 = vld [vmem:[#allocation2 + $0xb0] sm:$0xff]
    %v206 = vld [vmem:[#allocation2 + $0xb8] sm:$0xff]
    %v207 = vld [vmem:[#allocation2 + $0xc0] sm:$0xff]
    %v208 = vld [vmem:[#allocation2 + $0xc8] sm:$0xff]
    %v209 = vld [vmem:[#allocation2 + $0xd0] sm:$0xff]
    %v210 = vld [vmem:[#allocation2 + $0xd8] sm:$0xff]
    %v211 = vld [vmem:[#allocation2 + $0xe0] sm:$0xff]
    %v212 = vld [vmem:[#allocation2 + $0xe8] sm:$0xff]
    %v213 = vld [vmem:[#allocation2 + $0xf0] sm:$0xff]
    %v214 = vld [vmem:[#allocation2 + $0xf8] sm:$0xff]
    %v215 = vld [vmem:[#allocation2 + $0x100] sm:$0xff]
    %v216 = vld [vmem:[#allocation2 + $0x108] sm:$0xff]
    %v217 = vld [vmem:[#allocation2 + $0x110] sm:$0xff]
    %v218 = vld [vmem:[#allocation2 + $0x118] sm:$0xff]
    %v219 = vld [vmem:[#allocation2 + $0x120] sm:$0xff]
    %v220 = vld [vmem:[#allocation2 + $0x128] sm:$0xff]
    %v221 = vld [vmem:[#allocation2 + $0x130] sm:$0xff]
    %v222 = vld [vmem:[#allocation2 + $0x138] sm:$0xff]
    %v223 = vld [vmem:[#allocation2 + $0x140] sm:$0xff]
    %v224 = vld [vmem:[#allocation2 + $0x148] sm:$0xff]
    %v225 = vld [vmem:[#allocation2 + $0x150] sm:$0xff]
    %v226 = vld [vmem:[#allocation2 + $0x158] sm:$0xff]
    %v227 = vld [vmem:[#allocation2 + $0x160] sm:$0xff]
    %v228 = vld [vmem:[#allocation2 + $0x168] sm:$0xff]
    %v229 = vld [vmem:[#allocation2 + $0x170] sm:$0xff]
    %v230 = vld [vmem:[#allocation2 + $0x178] sm:$0xff]
    %v231 = vld [vmem:[#allocation2 + $0x180] sm:$0xff]
    %v232 = vld [vmem:[#allocation2 + $0x188] sm:$0xff]
    %v233 = vld [vmem:[#allocation2 + $0x190] sm:$0xff]
    %v234 = vld [vmem:[#allocation2 + $0x198] sm:$0xff]
    %v235 = vld [vmem:[#allocation2 + $0x1a0] sm:$0xff]
    %v236 = vld [vmem:[#allocation2 + $0x1a8] sm:$0xff]
    %v237 = vld [vmem:[#allocation2 + $0x1b0] sm:$0xff]
    %v238 = vld [vmem:[#allocation2 + $0x1b8] sm:$0xff]
    %v239 = vld [vmem:[#allocation2 + $0x1c0] sm:$0xff]
    %v240 = vld [vmem:[#allocation2 + $0x1c8] sm:$0xff]
    %v241 = vld [vmem:[#allocation2 + $0x1d0] sm:$0xff]
    %v242 = vld [vmem:[#allocation2 + $0x1d8] sm:$0xff]
    %v243 = vld [vmem:[#allocation2 + $0x1e0] sm:$0xff]
    %v244 = vld [vmem:[#allocation2 + $0x1e8] sm:$0xff]
    %v245 = vld [vmem:[#allocation2 + $0x1f0] sm:$0xff]
    %v246 = vld [vmem:[#allocation2 + $0x1f8] sm:$0xff]
    %v247 = vld [vmem:[%s4] sm:$0x3]
    %v249 = vlaneseq
    %v250 = vshrl.u32 %v249, 7
    %v251 = vsub.s32 0, %v250
    %v252 = vrot.slane %v247, %v251
    %v253 = vlaneseq
    %v254 = vshrl.u32 %v253, 7
    %v255 = vsub.s32 1, %v254
    %v256 = vrot.slane %v247, %v255
    %259 = vmatprep.subr.mxu0 %v184
    %260 = vmatpush1.msra.mxu0 %v183
    %261 = vmatprep.subr.mxu0 %v186
    %262 = vmatpush1.msra.mxu0 %v185
    %263 = vmatprep.subr.mxu0 %v188
    %264 = vmatpush1.msra.mxu0 %v187
    %265 = vmatprep.subr.mxu0 %v190
    %266 = vmatpush1.msra.mxu0 %v189
    %267 = vmatprep.subr.mxu0 %v192
    %268 = vmatpush1.msra.mxu0 %v191
    %269 = vmatprep.subr.mxu0 %v194
    %270 = vmatpush1.msra.mxu0 %v193
    %271 = vmatprep.subr.mxu0 %v196
    %272 = vmatpush1.msra.mxu0 %v195
    %273 = vmatprep.subr.mxu0 %v198
    %274 = vmatpush1.msra.mxu0 %v197
    %275 = vmatprep.subr.mxu0 %v200
    %276 = vmatpush1.msra.mxu0 %v199
    %277 = vmatprep.subr.mxu0 %v202
    %278 = vmatpush1.msra.mxu0 %v201
    %279 = vmatprep.subr.mxu0 %v204
    %280 = vmatpush1.msra.mxu0 %v203
    %281 = vmatprep.subr.mxu0 %v206
    %282 = vmatpush1.msra.mxu0 %v205
    %283 = vmatprep.subr.mxu0 %v208
    %284 = vmatpush1.msra.mxu0 %v207
    %285 = vmatprep.subr.mxu0 %v210
    %286 = vmatpush1.msra.mxu0 %v209
    %287 = vmatprep.subr.mxu0 %v212
    %288 = vmatpush1.msra.mxu0 %v211
    %289 = vmatprep.subr.mxu0 %v214
    %290 = vmatpush1.msra.mxu0 %v213
    %291 = vmatprep.subr.mxu0 %v216
    %292 = vmatpush1.msra.mxu0 %v215
    %293 = vmatprep.subr.mxu0 %v218
    %294 = vmatpush1.msra.mxu0 %v217
    %295 = vmatprep.subr.mxu0 %v220
    %296 = vmatpush1.msra.mxu0 %v219
    %297 = vmatprep.subr.mxu0 %v222
    %298 = vmatpush1.msra.mxu0 %v221
    %299 = vmatprep.subr.mxu0 %v224
    %300 = vmatpush1.msra.mxu0 %v223
    %301 = vmatprep.subr.mxu0 %v226
    %302 = vmatpush1.msra.mxu0 %v225
    %303 = vmatprep.subr.mxu0 %v228
    %304 = vmatpush1.msra.mxu0 %v227
    %305 = vmatprep.subr.mxu0 %v230
    %306 = vmatpush1.msra.mxu0 %v229
    %307 = vmatprep.subr.mxu0 %v232
    %308 = vmatpush1.msra.mxu0 %v231
    %309 = vmatprep.subr.mxu0 %v234
    %310 = vmatpush1.msra.mxu0 %v233
    %311 = vmatprep.subr.mxu0 %v236
    %312 = vmatpush1.msra.mxu0 %v235
    %313 = vmatprep.subr.mxu0 %v238
    %314 = vmatpush1.msra.mxu0 %v237
    %315 = vmatprep.subr.mxu0 %v240
    %316 = vmatpush1.msra.mxu0 %v239
    %317 = vmatprep.subr.mxu0 %v242
    %318 = vmatpush1.msra.mxu0 %v241
    %319 = vmatprep.subr.mxu0 %v244
    %320 = vmatpush1.msra.mxu0 %v243
    %321 = vmatprep.subr.mxu0 %v246
    %322 = vmatpush1.msra.mxu0 %v245
    %323 = vmatprep.mubr.f32.mxu0 %v176
    %324 = vmatmul.mubr.f32.gmra.mrb[0].mxu0 %v175
    %v325 = vpop.f32.mrb[0].mxu0
    %v326 = vadd.f32 %v252, %v325
    %v327 = vpop.f32.mrb[0].mxu0
    %v328 = vadd.f32 %v256, %v327
    %329 = vmatprep.mubr.f32.mxu0 %v178
    %330 = vmatmul.mubr.f32.gmra.mrb[0].mxu0 %v177
    %v331 = vpop.f32.mrb[0].mxu0
    %v332 = vadd.f32 %v252, %v331
    %v333 = vpop.f32.mrb[0].mxu0
    %v334 = vadd.f32 %v256, %v333
    %335 = vmatprep.mubr.f32.mxu0 %v180
    %336 = vmatmul.mubr.f32.gmra.mrb[0].mxu0 %v179
    %v337 = vpop.f32.mrb[0].mxu0
    %v338 = vadd.f32 %v252, %v337
    %v339 = vpop.f32.mrb[0].mxu0
    %v340 = vadd.f32 %v256, %v339
    %341 = vmatprep.mubr.f32.mxu0 %v182
    %342 = vmatmul.mubr.f32.gmra.mrb[0].mxu0 %v181
    %v343 = vpop.f32.mrb[0].mxu0
    %v344 = vadd.f32 %v252, %v343
    %v345 = vpop.f32.mrb[0].mxu0
    %v346 = vadd.f32 %v256, %v345
    %347 = vdwg.mxu0
    %v348 = vmax.f32 %v326, 0.0
    %v349 = vmax.f32 %v328, 0.0
    %v350 = vmax.f32 %v332, 0.0
    %v351 = vmax.f32 %v334, 0.0
    %v352 = vmax.f32 %v338, 0.0
    %v353 = vmax.f32 %v340, 0.0
    %v354 = vmax.f32 %v344, 0.0
    %v355 = vmax.f32 %v346, 0.0
    %v356 = vld [vmem:[%s5] sm:$0xff]
    %v357 = vld [vmem:[%s5 + $0x8] sm:$0xff]
    %v358 = vld [vmem:[%s5 + $0x10] sm:$0xff]
    %v359 = vld [vmem:[%s5 + $0x18] sm:$0xff]
    %v360 = vld [vmem:[%s5 + $0x20] sm:$0xff]
    %v361 = vld [vmem:[%s5 + $0x28] sm:$0xff]
    %v362 = vld [vmem:[%s5 + $0x30] sm:$0xff]
    %v363 = vld [vmem:[%s5 + $0x38] sm:$0xff]
    %v364 = vld [vmem:[%s5 + $0x40] sm:$0xff]
    %v365 = vld [vmem:[%s5 + $0x48] sm:$0xff]
    %v366 = vld [vmem:[%s5 + $0x50] sm:$0xff]
    %v367 = vld [vmem:[%s5 + $0x58] sm:$0xff]
    %v368 = vld [vmem:[%s5 + $0x60] sm:$0xff]
    %v369 = vld [vmem:[%s5 + $0x68] sm:$0xff]
    %v370 = vld [vmem:[%s5 + $0x70] sm:$0xff]
    %v371 = vld [vmem:[%s5 + $0x78] sm:$0xff]
    %v372 = vld [vmem:[%s5 + $0x80] sm:$0xff]
    %v373 = vld [vmem:[%s5 + $0x88] sm:$0xff]
    %v374 = vld [vmem:[%s5 + $0x90] sm:$0xff]
    %v375 = vld [vmem:[%s5 + $0x98] sm:$0xff]
    %v376 = vld [vmem:[%s5 + $0xa0] sm:$0xff]
    %v377 = vld [vmem:[%s5 + $0xa8] sm:$0xff]
    %v378 = vld [vmem:[%s5 + $0xb0] sm:$0xff]
    %v379 = vld [vmem:[%s5 + $0xb8] sm:$0xff]
    %v380 = vld [vmem:[%s5 + $0xc0] sm:$0xff]
    %v381 = vld [vmem:[%s5 + $0xc8] sm:$0xff]
    %v382 = vld [vmem:[%s5 + $0xd0] sm:$0xff]
    %v383 = vld [vmem:[%s5 + $0xd8] sm:$0xff]
    %v384 = vld [vmem:[%s5 + $0xe0] sm:$0xff]
    %v385 = vld [vmem:[%s5 + $0xe8] sm:$0xff]
    %v386 = vld [vmem:[%s5 + $0xf0] sm:$0xff]
    %v387 = vld [vmem:[%s5 + $0xf8] sm:$0xff]
    %v388 = vld [vmem:[%s6] sm:$0x1]
    %v390 = vlaneseq
    %v391 = vshrl.u32 %v390, 7
    %v392 = vsub.s32 0, %v391
    %v393 = vrot.slane %v388, %v392
    %395 = vmatprep.subr.mxu0 0.0
    %396 = vmatpush1.msra.mxu0 %v356
    %397 = vmatprep.subr.mxu0 0.0
    %398 = vmatpush1.msra.mxu0 %v357
    %399 = vmatprep.subr.mxu0 0.0
    %400 = vmatpush1.msra.mxu0 %v358
    %401 = vmatprep.subr.mxu0 0.0
    %402 = vmatpush1.msra.mxu0 %v359
    %403 = vmatprep.subr.mxu0 0.0
    %404 = vmatpush1.msra.mxu0 %v360
    %405 = vmatprep.subr.mxu0 0.0
    %406 = vmatpush1.msra.mxu0 %v361
    %407 = vmatprep.subr.mxu0 0.0
    %408 = vmatpush1.msra.mxu0 %v362
    %409 = vmatprep.subr.mxu0 0.0
    %410 = vmatpush1.msra.mxu0 %v363
    %411 = vmatprep.subr.mxu0 0.0
    %412 = vmatpush1.msra.mxu0 %v364
    %413 = vmatprep.subr.mxu0 0.0
    %414 = vmatpush1.msra.mxu0 %v365
    %415 = vmatprep.subr.mxu0 0.0
    %416 = vmatpush1.msra.mxu0 %v366
    %417 = vmatprep.subr.mxu0 0.0
    %418 = vmatpush1.msra.mxu0 %v367
    %419 = vmatprep.subr.mxu0 0.0
    %420 = vmatpush1.msra.mxu0 %v368
    %421 = vmatprep.subr.mxu0 0.0
    %422 = vmatpush1.msra.mxu0 %v369
    %423 = vmatprep.subr.mxu0 0.0
    %424 = vmatpush1.msra.mxu0 %v370
    %425 = vmatprep.subr.mxu0 0.0
    %426 = vmatpush1.msra.mxu0 %v371
    %427 = vmatprep.subr.mxu0 0.0
    %428 = vmatpush1.msra.mxu0 %v372
    %429 = vmatprep.subr.mxu0 0.0
    %430 = vmatpush1.msra.mxu0 %v373
    %431 = vmatprep.subr.mxu0 0.0
    %432 = vmatpush1.msra.mxu0 %v374
    %433 = vmatprep.subr.mxu0 0.0
    %434 = vmatpush1.msra.mxu0 %v375
    %435 = vmatprep.subr.mxu0 0.0
    %436 = vmatpush1.msra.mxu0 %v376
    %437 = vmatprep.subr.mxu0 0.0
    %438 = vmatpush1.msra.mxu0 %v377
    %439 = vmatprep.subr.mxu0 0.0
    %440 = vmatpush1.msra.mxu0 %v378
    %441 = vmatprep.subr.mxu0 0.0
    %442 = vmatpush1.msra.mxu0 %v379
    %443 = vmatprep.subr.mxu0 0.0
    %444 = vmatpush1.msra.mxu0 %v380
    %445 = vmatprep.subr.mxu0 0.0
    %446 = vmatpush1.msra.mxu0 %v381
    %447 = vmatprep.subr.mxu0 0.0
    %448 = vmatpush1.msra.mxu0 %v382
    %449 = vmatprep.subr.mxu0 0.0
    %450 = vmatpush1.msra.mxu0 %v383
    %451 = vmatprep.subr.mxu0 0.0
    %452 = vmatpush1.msra.mxu0 %v384
    %453 = vmatprep.subr.mxu0 0.0
    %454 = vmatpush1.msra.mxu0 %v385
    %455 = vmatprep.subr.mxu0 0.0
    %456 = vmatpush1.msra.mxu0 %v386
    %457 = vmatprep.subr.mxu0 0.0
    %458 = vmatpush1.msra.mxu0 %v387
    %459 = vmatprep.mubr.f32.mxu0 %v349
    %460 = vmatmul.mubr.f32.gmra.mrb[0].mxu0 %v348
    %v461 = vpop.f32.mrb[0].mxu0
    %v462 = vadd.f32 %v393, %v461
    %v463 = vpop.f32.mrb[0].mxu0
    %464 = vmatprep.mubr.f32.mxu0 %v351
    %465 = vmatmul.mubr.f32.gmra.mrb[0].mxu0 %v350
    %v466 = vpop.f32.mrb[0].mxu0
    %v467 = vadd.f32 %v393, %v466
    %v468 = vpop.f32.mrb[0].mxu0
    %469 = vmatprep.mubr.f32.mxu0 %v353
    %470 = vmatmul.mubr.f32.gmra.mrb[0].mxu0 %v352
    %v471 = vpop.f32.mrb[0].mxu0
    %v472 = vadd.f32 %v393, %v471
    %v473 = vpop.f32.mrb[0].mxu0
    %474 = vmatprep.mubr.f32.mxu0 %v355
    %475 = vmatmul.mubr.f32.gmra.mrb[0].mxu0 %v354
    %v476 = vpop.f32.mrb[0].mxu0
    %v477 = vadd.f32 %v393, %v476
    %v478 = vpop.f32.mrb[0].mxu0
    %479 = vdwg.mxu0
    %vm480 = vcmask 261120
    %481 = vst.msk [vmem:[#allocation5] sm:$0xff] %vm480, %v462
    %482 = vst.msk [vmem:[#allocation5 + $0x8] sm:$0xff] %vm480, %v467
    %483 = vst.msk [vmem:[#allocation5 + $0x10] sm:$0xff] %vm480, %v472
    %484 = vst.msk [vmem:[#allocation5 + $0x18] sm:$0xff] %vm480, %v477
    // Predicated region
    $region34: #{tpu_custom_call.1} parent=1 // pred_check
      _
    $region35: #{tpu_custom_call.1} parent=1 // pred_check_branch
      %486 = sbr.rel (0) target = $region37
    $region36: #{tpu_custom_call.1} parent=1 // pred_region
      %s488 = ssub.s32 512, 512
      %489 = vsyncadd [#allocation4], %s488
      %s490 = sshll.u32 [#allocation5], 4
      %s491 = int_to_ptr.vmem [resolvable:$true] %s490
      %496 = dma.vmem_to_hbm [thread:$0]  %s491, 512, %s7, [#allocation4], 128, 128, 8
    $region37: #{tpu_custom_call.1} parent=1 // pred_fallthru
      _
    // Predicated region
    $region38: #{tpu_custom_call.1} parent=1 // pred_check
      _
    $region39: #{tpu_custom_call.1} parent=1 // pred_check_branch
      %498 = sbr.rel (0) target = $region41
    $region40: #{tpu_custom_call.1} parent=1 // pred_region
      %499 = dma.done [#allocation4], 512
    $region41: #{tpu_custom_call.1} parent=1 // pred_fallthru
      _
    %500 = vsyncpa [#allocation3], 1
    %501 = vsyncpa [#allocation4], 1

</llo_original>
